<compile_context>
chip_gen: v6e
topology: v6e:2x2x1
jax: 0.10.0
libtpu: 0.0.40
codegen_flags: <defaults>
</compile_context>

<pallas_src>
import jax
import jax.numpy as jnp
from jax.experimental import pallas as pl
from jax.experimental.pallas import tpu as pltpu

LANE = 128                       # TPU lane width (spatial tile granularity)
TARGET_TILE_BYTES = 2 * 1024 * 1024   # ~2 MiB of activation per grid step


# ------------------------------ Pallas kernel ------------------------------

def _residual_kernel(x_ref, w1_ref, w2_ref, vec_ref, out_ref):
    """Fused Residual_module on one (C, TS) slab (channels x spatial tile).

    r = W1 @ x + b1 ; r = PReLU(r, a1) ; r = W2 @ r + b2
    out = PReLU((x + r) / 2, a2)

    Both 1x1 convs are channel matmuls on the MXU (weight on the left); the
    whole chain stays in VMEM (single HBM read of x, single HBM write of out).
    """
    x = x_ref[...]                              # load the tile once, reuse
    x_f32 = x.astype(jnp.float32)               # residual add in f32

    v = vec_ref[...].astype(jnp.float32)        # (C, 4) = [b1 | a1 | b2 | a2]
    b1, a1, b2, a2 = v[:, 0:1], v[:, 1:2], v[:, 2:3], v[:, 3:4]

    w1 = w1_ref[...]
    y = jnp.dot(w1, x.astype(w1.dtype),
                preferred_element_type=jnp.float32) + b1
    y = jnp.where(y >= 0, y, a1 * y)            # PReLU 1

    w2 = w2_ref[...]
    y = jnp.dot(w2, y.astype(w2.dtype),
                preferred_element_type=jnp.float32) + b2

    out = (x_f32 + y) * 0.5                     # mean(stack([x, r]), 0)
    out = jnp.where(out >= 0, out, a2 * out)    # PReLU 2
    out_ref[...] = out.astype(out_ref.dtype)


# -------------------------------- wrapper ----------------------------------

def residual_module(x_nchw, params, *, tile_s=None, mxu_dtype=None,
                    target_tile_bytes=TARGET_TILE_BYTES):
    """Pallas forward of Residual_module.

    x_nchw: (N, C, H, W).  params: w1/w2 as (C_out, C_in), b1/b2/a1/a2 as (C,).
    mxu_dtype: optional dtype (e.g. jnp.bfloat16) for the matmul operands on
    v6e/v7x; accumulation and the residual/PReLU math stay in f32.
    """
    N, C, H, W = x_nchw.shape
    S = H * W
    dtype = x_nchw.dtype

    # Free reshape: collapse the contiguous H, W dims (no transpose, no pad).
    x = x_nchw.reshape(N, C, S)

    # Spatial tile: multiple of 128 lanes, sized to ~target bytes per step.
    if tile_s is None:
        ts = target_tile_bytes // max(C * dtype.itemsize, 1)
        ts = max(LANE, (ts // LANE) * LANE)
    else:
        ts = tile_s
    if ts >= S:
        ts = S                    # single spatial block (full-dim is allowed)
    n_s = pl.cdiv(S, ts)          # ragged last block handled by Pallas masking

    w1, w2 = params['w1'], params['w2']
    if mxu_dtype is not None:
        w1 = w1.astype(mxu_dtype)
        w2 = w2.astype(mxu_dtype)
    # Merge the four per-channel vectors into one constant (C, 4) operand.
    vec = jnp.stack([params['b1'], params['a1'], params['b2'], params['a2']],
                    axis=1).astype(jnp.float32)

    out = pl.pallas_call(
        _residual_kernel,
        out_shape=jax.ShapeDtypeStruct((N, C, S), dtype),
        grid=(N, n_s),
        in_specs=[
            pl.BlockSpec((None, C, ts), lambda n, s: (n, 0, s)),  # x slab
            pl.BlockSpec((C, C), lambda n, s: (0, 0)),            # w1 (resident)
            pl.BlockSpec((C, C), lambda n, s: (0, 0)),            # w2 (resident)
            pl.BlockSpec((C, 4), lambda n, s: (0, 0)),            # [b1,a1,b2,a2]
        ],
        out_specs=pl.BlockSpec((None, C, ts), lambda n, s: (n, 0, s)),
        compiler_params=pltpu.CompilerParams(
            dimension_semantics=("parallel", "parallel"),
            vmem_limit_bytes=32 * 1024 * 1024),
    )(x, w1, w2, vec)

    return out.reshape(N, C, H, W)


# ----------------------------- params & reference ---------------------------

def init_params(key, in_ch, dtype=jnp.float32):
    # w stored as (C_out, C_in) so y = w @ x  ==  Conv2d 1x1 (PyTorch layout).
    # (nn.PReLU(in_ch, 0) inits slopes to 0; random slopes here just exercise
    # the negative branch -- forward semantics are identical.)
    ks = jax.random.split(key, 6)
    s = 1.0 / jnp.sqrt(in_ch)
    return dict(
        w1=(s * jax.random.normal(ks[0], (in_ch, in_ch))).astype(dtype),
        b1=(s * jax.random.normal(ks[1], (in_ch,))).astype(dtype),
        a1=(0.1 * jax.random.normal(ks[2], (in_ch,))).astype(dtype),
        w2=(s * jax.random.normal(ks[3], (in_ch, in_ch))).astype(dtype),
        b2=(s * jax.random.normal(ks[4], (in_ch,))).astype(dtype),
        a2=(0.1 * jax.random.normal(ks[5], (in_ch,))).astype(dtype),
    )


def residual_module_ref(x_nchw, params):
    # Pure-JAX reference mirroring the PyTorch module (NCHW throughout).
    def conv1x1(x, w, b):
        return jnp.einsum('oi,nihw->nohw', w, x) + b[None, :, None, None]

    def prelu(x, a):
        return jnp.where(x >= 0, x, a[None, :, None, None] * x)

    y = prelu(conv1x1(x_nchw, params['w1'], params['b1']), params['a1'])
    y = conv1x1(y, params['w2'], params['b2'])
    out = (x_nchw + y) * 0.5
    return prelu(out, params['a2'])


# ---------------------------------- main ------------------------------------

if __name__ == "__main__":
    key = jax.random.PRNGKey(0)
    kx, kp, kx2 = jax.random.split(key, 3)

    C = 32
    params = init_params(kp, C)

    # --- config A: default tiling, f32 MXU operands (matches reference) ----
    N, H, W = 2, 16, 16
    x = jax.random.normal(kx, (N, C, H, W), jnp.float32)
    fwd = jax.jit(residual_module)
    out = jax.block_until_ready(fwd(x, params))
    ref = residual_module_ref(x, params)
    assert out.shape == (N, C, H, W), out.shape
    assert bool(jnp.all(jnp.isfinite(out)))
    err = float(jnp.max(jnp.abs(out - ref)))
    assert jnp.allclose(out, ref, atol=1e-4, rtol=1e-4), err

    # --- config B: multi-tile grid + ragged spatial edge + bf16 MXU operands
    N2, H2, W2 = 1, 18, 18          # S = 324: ragged vs. tile_s = 128
    x2 = jax.random.normal(kx2, (N2, C, H2, W2), jnp.float32)
    fwd_bf16 = jax.jit(lambda a, p: residual_module(
        a, p, tile_s=128, mxu_dtype=jnp.bfloat16))
    out2 = jax.block_until_ready(fwd_bf16(x2, params))
    ref2 = residual_module_ref(x2, params)
    assert out2.shape == (N2, C, H2, W2), out2.shape
    assert bool(jnp.all(jnp.isfinite(out2)))
    err2 = float(jnp.max(jnp.abs(out2 - ref2)))
    assert jnp.allclose(out2, ref2, atol=5e-2, rtol=5e-2), err2

    print("KERNEL_OK")
</pallas_src>

<mosaic_0001>
module attributes {stable_mosaic.version = 11 : i64} {
  func.func @_residual_kernel(%arg0: i32, %arg1: i32, %arg2: memref<1x32x256xf32, #tpu.memory_space<vmem>>, %arg3: memref<32x32xf32, #tpu.memory_space<vmem>>, %arg4: memref<32x32xf32, #tpu.memory_space<vmem>>, %arg5: memref<32x4xf32, #tpu.memory_space<vmem>>, %arg6: memref<1x32x256xf32, #tpu.memory_space<vmem>>) attributes {dimension_semantics = [#tpu.dimension_semantics<parallel>, #tpu.dimension_semantics<parallel>], iteration_bounds = array<i64: 2, 1>, scalar_prefetch = 0 : i64, scratch_operands = 0 : i64, tpu.core_type = #tpu.core_type<tc>, window_params = [{transform_indices = @transform_0, window_bounds = array<i64: 1, 32, 256>}, {pipeline_mode = #tpu.pipeline_mode<synchronous>, transform_indices = @transform_1, window_bounds = array<i64: 32, 32>}, {pipeline_mode = #tpu.pipeline_mode<synchronous>, transform_indices = @transform_2, window_bounds = array<i64: 32, 32>}, {pipeline_mode = #tpu.pipeline_mode<synchronous>, transform_indices = @transform_3, window_bounds = array<i64: 32, 4>}, {transform_indices = @transform_4, window_bounds = array<i64: 1, 32, 256>}]} {
    %c0 = arith.constant 0 : index
    %c0_0 = arith.constant 0 : index
    %c0_1 = arith.constant 0 : index
    %0 = vector.load %arg2[%c0, %c0_0, %c0_1] : memref<1x32x256xf32, #tpu.memory_space<vmem>>, vector<1x32x256xf32>
    %1 = vector.shape_cast %0 : vector<1x32x256xf32> to vector<32x256xf32>
    %c0_2 = arith.constant 0 : index
    %c0_3 = arith.constant 0 : index
    %2 = vector.load %arg5[%c0_2, %c0_3] : memref<32x4xf32, #tpu.memory_space<vmem>>, vector<32x4xf32>
    %3 = vector.extract_strided_slice %2 {offsets = [0, 0], sizes = [32, 1], strides = [1, 1]} : vector<32x4xf32> to vector<32x1xf32>
    %4 = vector.extract_strided_slice %2 {offsets = [0, 1], sizes = [32, 1], strides = [1, 1]} : vector<32x4xf32> to vector<32x1xf32>
    %5 = vector.extract_strided_slice %2 {offsets = [0, 2], sizes = [32, 1], strides = [1, 1]} : vector<32x4xf32> to vector<32x1xf32>
    %6 = vector.extract_strided_slice %2 {offsets = [0, 3], sizes = [32, 1], strides = [1, 1]} : vector<32x4xf32> to vector<32x1xf32>
    %c0_4 = arith.constant 0 : index
    %c0_5 = arith.constant 0 : index
    %7 = vector.load %arg3[%c0_4, %c0_5] : memref<32x32xf32, #tpu.memory_space<vmem>>, vector<32x32xf32>
    %cst = arith.constant dense<0.000000e+00> : vector<32x256xf32>
    %8 = tpu.matmul %7, %1, %cst {dimension_numbers = #tpu.dot_dimension_numbers<[1], [0], [0], [1], [0, 0, 1, 1], [], []>} : vector<32x32xf32>, vector<32x256xf32>, vector<32x256xf32> -> vector<32x256xf32>
    %9 = vector.broadcast %3 : vector<32x1xf32> to vector<32x256xf32>
    %10 = arith.addf %8, %9 : vector<32x256xf32>
    %cst_6 = arith.constant 0.000000e+00 : f32
    %11 = vector.broadcast %cst_6 : f32 to vector<32x256xf32>
    %12 = arith.cmpf oge, %10, %11 : vector<32x256xf32>
    %13 = vector.broadcast %4 : vector<32x1xf32> to vector<32x256xf32>
    %14 = arith.mulf %13, %10 : vector<32x256xf32>
    %15 = arith.select %12, %10, %14 : vector<32x256xi1>, vector<32x256xf32>
    %c0_7 = arith.constant 0 : index
    %c0_8 = arith.constant 0 : index
    %16 = vector.load %arg4[%c0_7, %c0_8] : memref<32x32xf32, #tpu.memory_space<vmem>>, vector<32x32xf32>
    %cst_9 = arith.constant dense<0.000000e+00> : vector<32x256xf32>
    %17 = tpu.matmul %16, %15, %cst_9 {dimension_numbers = #tpu.dot_dimension_numbers<[1], [0], [0], [1], [0, 0, 1, 1], [], []>} : vector<32x32xf32>, vector<32x256xf32>, vector<32x256xf32> -> vector<32x256xf32>
    %18 = vector.broadcast %5 : vector<32x1xf32> to vector<32x256xf32>
    %19 = arith.addf %17, %18 : vector<32x256xf32>
    %20 = arith.addf %1, %19 : vector<32x256xf32>
    %cst_10 = arith.constant 5.000000e-01 : f32
    %21 = vector.broadcast %cst_10 : f32 to vector<32x256xf32>
    %22 = arith.mulf %20, %21 : vector<32x256xf32>
    %cst_11 = arith.constant 0.000000e+00 : f32
    %23 = vector.broadcast %cst_11 : f32 to vector<32x256xf32>
    %24 = arith.cmpf oge, %22, %23 : vector<32x256xf32>
    %25 = vector.broadcast %6 : vector<32x1xf32> to vector<32x256xf32>
    %26 = arith.mulf %25, %22 : vector<32x256xf32>
    %27 = arith.select %24, %22, %26 : vector<32x256xi1>, vector<32x256xf32>
    %c0_12 = arith.constant 0 : index
    %c0_13 = arith.constant 0 : index
    %c0_14 = arith.constant 0 : index
    %28 = vector.load %arg6[%c0_12, %c0_13, %c0_14] : memref<1x32x256xf32, #tpu.memory_space<vmem>>, vector<1x32x256xf32>
    %29 = vector.shape_cast %28 : vector<1x32x256xf32> to vector<32x256xf32>
    %30 = vector.shape_cast %27 : vector<32x256xf32> to vector<1x32x256xf32>
    tpu.vector_store %arg6[%c0_12, %c0_13, %c0_14], %30 {strides = array<i32>} : memref<1x32x256xf32, #tpu.memory_space<vmem>>, vector<1x32x256xf32>,
    return
  }
  func.func @transform_0(%arg0: i32, %arg1: i32) -> (i32, i32, i32) {
    %c0_i32 = arith.constant 0 : i32
    %c0_i32_0 = arith.constant 0 : i32
    return %arg0, %c0_i32, %arg1 : i32, i32, i32
  }
  func.func @transform_1(%arg0: i32, %arg1: i32) -> (i32, i32) {
    %c0_i32 = arith.constant 0 : i32
    %c0_i32_0 = arith.constant 0 : i32
    %c0_i32_1 = arith.constant 0 : i32
    return %c0_i32, %c0_i32_0 : i32, i32
  }
  func.func @transform_2(%arg0: i32, %arg1: i32) -> (i32, i32) {
    %c0_i32 = arith.constant 0 : i32
    %c0_i32_0 = arith.constant 0 : i32
    %c0_i32_1 = arith.constant 0 : i32
    return %c0_i32, %c0_i32_0 : i32, i32
  }
  func.func @transform_3(%arg0: i32, %arg1: i32) -> (i32, i32) {
    %c0_i32 = arith.constant 0 : i32
    %c0_i32_0 = arith.constant 0 : i32
    %c0_i32_1 = arith.constant 0 : i32
    return %c0_i32, %c0_i32_0 : i32, i32
  }
  func.func @transform_4(%arg0: i32, %arg1: i32) -> (i32, i32, i32) {
    %c0_i32 = arith.constant 0 : i32
    %c0_i32_0 = arith.constant 0 : i32
    return %arg0, %c0_i32, %arg1 : i32, i32, i32
  }
}

</mosaic_0001>

<llo_original>
// kernel: residual_module.1
$region0: #{residual_module.1}
  #allocation0 [shape = 'u32[]', space=smem, size = 0x4, offset = 0x4, fixed_abs, tag = 'smem constant byte address 0x4 - core index']
  #allocation1 [shape = 'u32[144,128]{1,0:T(1,128)}', space=vmem, size = 0x12000, scoped, tag = 'internal scratch']
  %s0 = inlined_call_operand.vmem [shape: f32[2,32,256], index: 0, kind: input, shape index: {}]
  %s1 = inlined_call_operand.vmem [shape: f32[32,32], index: 1, kind: input, shape index: {}]
  %s2 = inlined_call_operand.vmem [shape: f32[32,32], index: 2, kind: input, shape index: {}]
  %s3 = inlined_call_operand.vmem [shape: f32[32,4], index: 3, kind: input, shape index: {}]
  %s4 = inlined_call_operand.vmem [shape: f32[2,32,256], index: 4, kind: output, shape index: {}]
  %s5 = sld [smem:[#allocation0]]
  $region49: #{residual_module.1} parent=0
    _
  %s7 = ssub.s32 1, %s5
  %s8 = scalar_select 0, %s7, %s5
  loop: start=0, step=1, limit=4
  $region2: #{residual_module.1} parent=0 // loop_pre_header
    _
  $region3: #{residual_module.1} parent=0 // loop_header
    %s10 = sphi 0, %s14
    %p11 = scmp.ge.s32.totalorder %s10, 4
    %s17 = sphi 0, %s29
    %s18 = sphi 0, %s25
    %s19 = sphi 0, %s17
    %s20 = sphi 0, %s18
    %s21 = sphi 0, %s19
    %s22 = sphi 0, %s20
    %s34 = sphi 0, %s36
    %s37 = sphi 0, %s34
    %s38 = sphi 0, %s37
    %s54 = sphi 0, %s38
    %s58 = sphi 0, %s58
    %s60 = sphi 0, %s58
    %s61 = sphi 0, %s60
    %s75 = sphi 0, %s61
    %s79 = sphi 0, %s79
    %s81 = sphi 0, %s79
    %s82 = sphi 0, %s81
    %s96 = sphi 0, %s82
    %s100 = sphi 0, %s100
    %s102 = sphi 0, %s100
    %s103 = sphi 0, %s102
    %s117 = sphi 0, %s103
    %s125 = sphi 0, %s127
    %s128 = sphi 0, %s125
    %s129 = sphi 0, %s128
    %s145 = sphi 0, %s129
  $region4: #{residual_module.1} parent=0 // loop_header_branch
    %13 = sbr.rel (%p11) target = $region8
  $region5: #{residual_module.1} parent=0 // loop_body
    %s15 = ssub.s32 %s10, 1
    %s16 = ssub.s32 %s10, 2
    %s23 = sadd.s32 1, %s18
    %p24 = scmp.ge.s32.totalorder %s23, 1
    %s25 = scalar_select %p24, 0, %s23
    %s26 = sadd.s32 1, %s17
    %s27 = scalar_select %p24, %s26, %s17
    %p28 = scmp.ge.s32.totalorder %s27, 2
    %s29 = scalar_select %p28, 0, %s27
    %s30 = ssub.s32 %s17, %s29
    %s31 = ssub.s32 %s18, %s25
    %s32 = sor.u32 %s30, %s31
    %p33 = scmp.eq.s32.totalorder %s32, 0
    %s35 = sadd.s32 %s34, 1
    %s36 = scalar_select %p33, %s34, %s35
    %p39 = pneg %p33
    %p40 = scmp.eq.s32.totalorder %s10, 1
    %p41 = por %p39, %p40
    %p42 = scmp.ne.s32.totalorder %s34, %s37
    %p43 = scmp.eq.s32.totalorder %s10, 0
    %p44 = por %p42, %p43
    %p45 = scmp.ne.s32.totalorder %s34, %s37
    %p46 = scmp.eq.s32.totalorder %s15, 1
    %p47 = por %p45, %p46
    %p48 = scmp.ne.s32.totalorder %s37, %s38
    %p49 = scmp.eq.s32.totalorder %s15, 0
    %p50 = por %p48, %p49
    %p51 = scmp.ne.s32.totalorder %s37, %s38
    %p52 = scmp.eq.s32.totalorder %s16, 1
    %p53 = por %p51, %p52
    %p55 = scmp.ne.s32.totalorder %s38, %s54
    %p56 = scmp.eq.s32.totalorder %s16, 0
    %p57 = por %p55, %p56
    %s59 = sadd.s32 %s58, 1
    %p62 = scmp.eq.s32.totalorder %s10, 1
    %p63 = scmp.ne.s32.totalorder %s58, %s60
    %p64 = scmp.eq.s32.totalorder %s10, 0
    %p65 = por %p63, %p64
    %p66 = scmp.ne.s32.totalorder %s58, %s60
    %p67 = scmp.eq.s32.totalorder %s15, 1
    %p68 = por %p66, %p67
    %p69 = scmp.ne.s32.totalorder %s60, %s61
    %p70 = scmp.eq.s32.totalorder %s15, 0
    %p71 = por %p69, %p70
    %p72 = scmp.ne.s32.totalorder %s60, %s61
    %p73 = scmp.eq.s32.totalorder %s16, 1
    %p74 = por %p72, %p73
    %p76 = scmp.ne.s32.totalorder %s61, %s75
    %p77 = scmp.eq.s32.totalorder %s16, 0
    %p78 = por %p76, %p77
    %s80 = sadd.s32 %s79, 1
    %p83 = scmp.eq.s32.totalorder %s10, 1
    %p84 = scmp.ne.s32.totalorder %s79, %s81
    %p85 = scmp.eq.s32.totalorder %s10, 0
    %p86 = por %p84, %p85
    %p87 = scmp.ne.s32.totalorder %s79, %s81
    %p88 = scmp.eq.s32.totalorder %s15, 1
    %p89 = por %p87, %p88
    %p90 = scmp.ne.s32.totalorder %s81, %s82
    %p91 = scmp.eq.s32.totalorder %s15, 0
    %p92 = por %p90, %p91
    %p93 = scmp.ne.s32.totalorder %s81, %s82
    %p94 = scmp.eq.s32.totalorder %s16, 1
    %p95 = por %p93, %p94
    %p97 = scmp.ne.s32.totalorder %s82, %s96
    %p98 = scmp.eq.s32.totalorder %s16, 0
    %p99 = por %p97, %p98
    %s101 = sadd.s32 %s100, 1
    %p104 = scmp.eq.s32.totalorder %s10, 1
    %p105 = scmp.ne.s32.totalorder %s100, %s102
    %p106 = scmp.eq.s32.totalorder %s10, 0
    %p107 = por %p105, %p106
    %p108 = scmp.ne.s32.totalorder %s100, %s102
    %p109 = scmp.eq.s32.totalorder %s15, 1
    %p110 = por %p108, %p109
    %p111 = scmp.ne.s32.totalorder %s102, %s103
    %p112 = scmp.eq.s32.totalorder %s15, 0
    %p113 = por %p111, %p112
    %p114 = scmp.ne.s32.totalorder %s102, %s103
    %p115 = scmp.eq.s32.totalorder %s16, 1
    %p116 = por %p114, %p115
    %p118 = scmp.ne.s32.totalorder %s103, %s117
    %p119 = scmp.eq.s32.totalorder %s16, 0
    %p120 = por %p118, %p119
    %s121 = ssub.s32 %s17, %s29
    %s122 = ssub.s32 %s18, %s25
    %s123 = sor.u32 %s121, %s122
    %p124 = scmp.eq.s32.totalorder %s123, 0
    %s126 = sadd.s32 %s125, 1
    %s127 = scalar_select %p124, %s125, %s126
    %p130 = pneg %p124
    %p131 = scmp.eq.s32.totalorder %s10, 1
    %p132 = por %p130, %p131
    %p133 = scmp.ne.s32.totalorder %s125, %s128
    %p134 = scmp.eq.s32.totalorder %s10, 0
    %p135 = por %p133, %p134
    %p136 = scmp.ne.s32.totalorder %s125, %s128
    %p137 = scmp.eq.s32.totalorder %s15, 1
    %p138 = por %p136, %p137
    %p139 = scmp.ne.s32.totalorder %s128, %s129
    %p140 = scmp.eq.s32.totalorder %s15, 0
    %p141 = por %p139, %p140
    %p142 = scmp.ne.s32.totalorder %s128, %s129
    %p143 = scmp.eq.s32.totalorder %s16, 1
    %p144 = por %p142, %p143
    %p146 = scmp.ne.s32.totalorder %s129, %s145
    %p147 = scmp.eq.s32.totalorder %s16, 0
    %p148 = por %p146, %p147
    %p149 = scmp.le.s32.totalorder 1, %s10
    %p150 = scmp.lt.s32.totalorder %s10, 3
    %p151 = pnand %p149, %p150
    %p152 = pneg %p151
    // Predicated region
    $region9: #{residual_module.1} parent=5 // pred_check
      _
    $region10: #{residual_module.1} parent=5 // pred_check_branch
      %154 = sbr.rel (%p151) target = $region12
    $region11: #{residual_module.1} parent=5 // pred_region
      %s155 = ssub.s32 %s10, 1
      // Predicated region
      $region13: #{residual_module.1} parent=11 // pred_check
        %p156 = pneg %p71
      $region14: #{residual_module.1} parent=11 // pred_check_branch
        %158 = sbr.rel (%p156) target = $region16
      $region15: #{residual_module.1} parent=11 // pred_region
        _
      $region16: #{residual_module.1} parent=11 // pred_fallthru
        _
      // Predicated region
      $region17: #{residual_module.1} parent=11 // pred_check
        %p159 = pneg %p92
      $region18: #{residual_module.1} parent=11 // pred_check_branch
        %161 = sbr.rel (%p159) target = $region20
      $region19: #{residual_module.1} parent=11 // pred_region
        _
      $region20: #{residual_module.1} parent=11 // pred_fallthru
        _
      // Predicated region
      $region21: #{residual_module.1} parent=11 // pred_check
        %p162 = pneg %p113
      $region22: #{residual_module.1} parent=11 // pred_check_branch
        %164 = sbr.rel (%p162) target = $region24
      $region23: #{residual_module.1} parent=11 // pred_region
        _
      $region24: #{residual_module.1} parent=11 // pred_fallthru
        _
    $region12: #{residual_module.1} parent=5 // pred_fallthru
      _
    %p165 = scmp.lt.s32.totalorder %s10, 2
    // Predicated region
    $region25: #{residual_module.1} parent=5 // pred_check
      %p166 = pneg %p165
    $region26: #{residual_module.1} parent=5 // pred_check_branch
      %168 = sbr.rel (%p166) target = $region28
    $region27: #{residual_module.1} parent=5 // pred_region
      // Predicated region
      $region29: #{residual_module.1} parent=27 // pred_check
        %p169 = pneg %p44
      $region30: #{residual_module.1} parent=27 // pred_check_branch
        %171 = sbr.rel (%p169) target = $region32
      $region31: #{residual_module.1} parent=27 // pred_region
        %s172 = smul.u32 2, %s18
        %p173 = scmp.lt.s32.totalorder %s17, 1
        %s174 = scalar_select %p173, %s17, 1
        %p175 = scmp.lt.s32.totalorder %s172, 1
        %s176 = scalar_select %p175, %s172, 1
        %s177 = smul.addr %s174, 8
        %s178 = sadd.s32 %s176, %s177
        %s179 = smul.addr %s178, 8
        %s180 = scalar_lea.vmem %s0, %s179
        %s181 = smul.u32 2, %s18
      $region32: #{residual_module.1} parent=27 // pred_fallthru
        _
    $region28: #{residual_module.1} parent=5 // pred_fallthru
      _
    %p182 = scmp.le.s32.totalorder 1, %s10
    %p183 = scmp.lt.s32.totalorder %s10, 3
    %p184 = pnand %p182, %p183
    %p185 = pneg %p184
    // Predicated region
    $region33: #{residual_module.1} parent=5 // pred_check
      _
    $region34: #{residual_module.1} parent=5 // pred_check_branch
      %187 = sbr.rel (%p184) target = $region36
    $region35: #{residual_module.1} parent=5 // pred_region
      %s188 = ssub.s32 %s10, 1
      %s189 = smul.u32 2, %s20
      %p190 = scmp.lt.s32.totalorder %s19, 1
      %s191 = scalar_select %p190, %s19, 1
      %p192 = scmp.lt.s32.totalorder %s189, 1
      %s193 = scalar_select %p192, %s189, 1
      %s194 = smul.addr %s191, 8
      %s195 = sadd.s32 %s193, %s194
      %s196 = smul.addr %s195, 8
      %s197 = scalar_lea.vmem %s0, %s196
      %p198 = pneg %p50
      %p199 = pneg %p47
      %p200 = pneg %p71
      %p201 = pneg %p68
      %p202 = pneg %p92
      %p203 = pneg %p89
      %p204 = pneg %p113
      %p205 = pneg %p110
      %p206 = pneg %p141
      %p207 = pneg %p138
      %s208 = smul.u32 2, %s20
      %p209 = scmp.lt.s32.totalorder %s19, 1
      %s210 = scalar_select %p209, %s19, 1
      %p211 = scmp.lt.s32.totalorder %s208, 1
      %s212 = scalar_select %p211, %s208, 1
      %s213 = smul.addr %s210, 8
      %s214 = sadd.s32 %s212, %s213
      %s215 = smul.addr %s214, 8
      %s216 = scalar_lea.vmem %s4, %s215
      %s217 = smul.u32 2, %s20
      %p218 = scmp.lt.s32.totalorder %s19, 1
      %s219 = scalar_select %p218, %s19, 1
      %p220 = scmp.lt.s32.totalorder %s217, 1
      %s221 = scalar_select %p220, %s217, 1
      %s222 = smul.addr %s219, 8
      %s223 = sadd.s32 %s221, %s222
      %s224 = smul.addr %s223, 8
      %s225 = scalar_lea.vmem %s0, %s224
      %s226 = smul.u32 2, %s20
      %s227 = smul.u32 2, %s20
      %p228 = scmp.lt.s32.totalorder %s19, 1
      %s229 = scalar_select %p228, %s19, 1
      %p230 = scmp.lt.s32.totalorder %s227, 1
      %s231 = scalar_select %p230, %s227, 1
      %s232 = smul.addr %s229, 8
      %s233 = sadd.s32 %s231, %s232
      %s234 = smul.addr %s233, 8
      %s235 = scalar_lea.vmem %s4, %s234
      %s236 = smul.u32 2, %s20
      %v237 = vld [vmem:[%s225] sm:$0xff]
      %v238 = vld [vmem:[%s225 + $0x8] sm:$0xff]
      %v239 = vld [vmem:[%s225 + $0x10] sm:$0xff]
      %v240 = vld [vmem:[%s225 + $0x18] sm:$0xff]
      %v241 = vld [vmem:[%s225 + $0x20] sm:$0xff]
      %v242 = vld [vmem:[%s225 + $0x28] sm:$0xff]
      %v243 = vld [vmem:[%s225 + $0x30] sm:$0xff]
      %v244 = vld [vmem:[%s225 + $0x38] sm:$0xff]
      %v245 = vld [vmem:[%s3] sm:$0xff]
      %v246 = vld [vmem:[%s3 + $0x8] sm:$0xff]
      %v247 = vld [vmem:[%s3 + $0x10] sm:$0xff]
      %v248 = vld [vmem:[%s3 + $0x18] sm:$0xff]
      %v249 = vld [vmem:[%s1] sm:$0xff]
      %v250 = vld [vmem:[%s1 + $0x8] sm:$0xff]
      %v251 = vld [vmem:[%s1 + $0x10] sm:$0xff]
      %v252 = vld [vmem:[%s1 + $0x18] sm:$0xff]
      %254 = vset.pattern.permute.xlu0 0
      %255 = vperm.xlu0 %254, %v245
      %v256 = vpop.permute.xlu0 %255
      %259 = vset.pattern.permute.xlu0 0
      %260 = vperm.xlu0 %259, %v246
      %v261 = vpop.permute.xlu0 %260
      %264 = vset.pattern.permute.xlu0 0
      %265 = vperm.xlu0 %264, %v247
      %v266 = vpop.permute.xlu0 %265
      %269 = vset.pattern.permute.xlu0 0
      %270 = vperm.xlu0 %269, %v248
      %v271 = vpop.permute.xlu0 %270
      %vm273 = vcmask 261120
      %v275 = vsel %vm273, %v249, 0
      %v278 = vsel %vm273, %v250, 0
      %v281 = vsel %vm273, %v251, 0
      %v284 = vsel %vm273, %v252, 0
      %286 = vmatprep.subr.mxu0 0.0
      %287 = vmatpush1.msra.mxu0 0.0
      %288 = vmatprep.subr.mxu0 0.0
      %289 = vmatpush1.msra.mxu0 0.0
      %290 = vmatprep.subr.mxu0 0.0
      %291 = vmatpush1.msra.mxu0 0.0
      %292 = vmatprep.subr.mxu0 0.0
      %293 = vmatpush1.msra.mxu0 0.0
      %294 = vmatprep.subr.mxu0 0.0
      %295 = vmatpush1.msra.mxu0 0.0
      %296 = vmatprep.subr.mxu0 0.0
      %297 = vmatpush1.msra.mxu0 0.0
      %298 = vmatprep.subr.mxu0 0.0
      %299 = vmatpush1.msra.mxu0 0.0
      %300 = vmatprep.subr.mxu0 0.0
      %301 = vmatpush1.msra.mxu0 0.0
      %302 = vmatprep.subr.mxu0 0.0
      %303 = vmatpush1.msra.mxu0 0.0
      %304 = vmatprep.subr.mxu0 0.0
      %305 = vmatpush1.msra.mxu0 0.0
      %306 = vmatprep.subr.mxu0 0.0
      %307 = vmatpush1.msra.mxu0 0.0
      %308 = vmatprep.subr.mxu0 0.0
      %309 = vmatpush1.msra.mxu0 0.0
      %310 = vmatprep.subr.mxu0 %v244
      %311 = vmatpush1.msra.mxu0 %v243
      %312 = vmatprep.subr.mxu0 %v242
      %313 = vmatpush1.msra.mxu0 %v241
      %314 = vmatprep.subr.mxu0 %v240
      %315 = vmatpush1.msra.mxu0 %v239
      %316 = vmatprep.subr.mxu0 %v238
      %317 = vmatpush1.msra.mxu0 %v237
      %318 = vmatprep.subr.mxu0 0.0
      %319 = vmatpush2.msra.mxu0 0.0
      %320 = vmatprep.subr.mxu0 0.0
      %321 = vmatpush2.msra.mxu0 0.0
      %322 = vmatprep.subr.mxu0 0.0
      %323 = vmatpush2.msra.mxu0 0.0
      %324 = vmatprep.subr.mxu0 0.0
      %325 = vmatpush2.msra.mxu0 0.0
      %326 = vmatprep.subr.mxu0 0.0
      %327 = vmatpush2.msra.mxu0 0.0
      %328 = vmatprep.subr.mxu0 0.0
      %329 = vmatpush2.msra.mxu0 0.0
      %330 = vmatprep.subr.mxu0 0.0
      %331 = vmatpush2.msra.mxu0 0.0
      %332 = vmatprep.subr.mxu0 0.0
      %333 = vmatpush2.msra.mxu0 0.0
      %334 = vmatprep.subr.mxu0 0.0
      %335 = vmatpush2.msra.mxu0 0.0
      %336 = vmatprep.subr.mxu0 0.0
      %337 = vmatpush2.msra.mxu0 0.0
      %338 = vmatprep.subr.mxu0 0.0
      %339 = vmatpush2.msra.mxu0 0.0
      %340 = vmatprep.subr.mxu0 0.0
      %341 = vmatpush2.msra.mxu0 0.0
      %342 = vmatprep.subr.mxu0 0.0
      %343 = vmatpush2.msra.mxu0 0.0
      %344 = vmatprep.subr.mxu0 0.0
      %345 = vmatpush2.msra.mxu0 0.0
      %346 = vmatprep.subr.mxu0 0.0
      %347 = vmatpush2.msra.mxu0 0.0
      %348 = vmatprep.subr.mxu0 0.0
      %349 = vmatpush2.msra.mxu0 0.0
      %350 = vmatprep.mubr.f32.mxu0 0.0
      %351 = vmatmul.mubr.f32.gmra.mxu0 %v275
      %v352 = vpop.f32.mrf.mxu0
      %v353 = vadd.f32 %v256, %v352
      %v354 = vpop.f32.mrf.mxu0
      %v355 = vadd.f32 %v256, %v354
      %356 = vmatprep.mubr.f32.mxu0 0.0
      %357 = vmatmul.mubr.f32.gmra.mxu0 %v278
      %v358 = vpop.f32.mrf.mxu0
      %v359 = vadd.f32 %v261, %v358
      %v360 = vpop.f32.mrf.mxu0
      %v361 = vadd.f32 %v261, %v360
      %362 = vmatprep.mubr.f32.mxu0 0.0
      %363 = vmatmul.mubr.f32.gmra.mxu0 %v281
      %v364 = vpop.f32.mrf.mxu0
      %v365 = vadd.f32 %v266, %v364
      %v366 = vpop.f32.mrf.mxu0
      %v367 = vadd.f32 %v266, %v366
      %368 = vmatprep.mubr.f32.mxu0 0.0
      %369 = vmatmul.mubr.f32.gmra.mxu0 %v284
      %v370 = vpop.f32.mrf.mxu0
      %v371 = vadd.f32 %v271, %v370
      %v372 = vpop.f32.mrf.mxu0
      %v373 = vadd.f32 %v271, %v372
      %374 = vdwg.mxu0
      %vm375 = vcmp.ge.f32.partialorder %v353, 0.0
      %vm376 = vcmp.ge.f32.partialorder %v355, 0.0
      %vm377 = vcmp.ge.f32.partialorder %v359, 0.0
      %vm378 = vcmp.ge.f32.partialorder %v361, 0.0
      %vm379 = vcmp.ge.f32.partialorder %v365, 0.0
      %vm380 = vcmp.ge.f32.partialorder %v367, 0.0
      %vm381 = vcmp.ge.f32.partialorder %v371, 0.0
      %vm382 = vcmp.ge.f32.partialorder %v373, 0.0
      %383 = vset.pattern.permute.xlu0 1
      %384 = vperm.xlu0 %383, %v245
      %v385 = vpop.permute.xlu0 %384
      %387 = vset.pattern.permute.xlu0 1
      %388 = vperm.xlu0 %387, %v246
      %v389 = vpop.permute.xlu0 %388
      %391 = vset.pattern.permute.xlu0 1
      %392 = vperm.xlu0 %391, %v247
      %v393 = vpop.permute.xlu0 %392
      %395 = vset.pattern.permute.xlu0 1
      %396 = vperm.xlu0 %395, %v248
      %v397 = vpop.permute.xlu0 %396
      %v399 = vmul.f32 %v385, %v353
      %v400 = vmul.f32 %v385, %v355
      %v401 = vmul.f32 %v389, %v359
      %v402 = vmul.f32 %v389, %v361
      %v403 = vmul.f32 %v393, %v365
      %v404 = vmul.f32 %v393, %v367
      %v405 = vmul.f32 %v397, %v371
      %v406 = vmul.f32 %v397, %v373
      %v407 = vsel %vm375, %v353, %v399
      %v408 = vsel %vm376, %v355, %v400
      %v409 = vsel %vm377, %v359, %v401
      %v410 = vsel %vm378, %v361, %v402
      %v411 = vsel %vm379, %v365, %v403
      %v412 = vsel %vm380, %v367, %v404
      %v413 = vsel %vm381, %v371, %v405
      %v414 = vsel %vm382, %v373, %v406
      %v415 = vld [vmem:[%s2] sm:$0xff]
      %v416 = vld [vmem:[%s2 + $0x8] sm:$0xff]
      %v417 = vld [vmem:[%s2 + $0x10] sm:$0xff]
      %v418 = vld [vmem:[%s2 + $0x18] sm:$0xff]
      %419 = vset.pattern.permute.xlu0 2
      %420 = vperm.xlu0 %419, %v245
      %v421 = vpop.permute.xlu0 %420
      %423 = vset.pattern.permute.xlu0 2
      %424 = vperm.xlu0 %423, %v246
      %v425 = vpop.permute.xlu0 %424
      %427 = vset.pattern.permute.xlu0 2
      %428 = vperm.xlu0 %427, %v247
      %v429 = vpop.permute.xlu0 %428
      %431 = vset.pattern.permute.xlu0 2
      %432 = vperm.xlu0 %431, %v248
      %v433 = vpop.permute.xlu0 %432
      %v436 = vsel %vm273, %v415, 0
      %v439 = vsel %vm273, %v416, 0
      %v442 = vsel %vm273, %v417, 0
      %v445 = vsel %vm273, %v418, 0
      %447 = vmatprep.subr.mxu0 0.0
      %448 = vmatpush1.msra.mxu0 0.0
      %449 = vmatprep.subr.mxu0 0.0
      %450 = vmatpush1.msra.mxu0 0.0
      %451 = vmatprep.subr.mxu0 0.0
      %452 = vmatpush1.msra.mxu0 0.0
      %453 = vmatprep.subr.mxu0 0.0
      %454 = vmatpush1.msra.mxu0 0.0
      %455 = vmatprep.subr.mxu0 0.0
      %456 = vmatpush1.msra.mxu0 0.0
      %457 = vmatprep.subr.mxu0 0.0
      %458 = vmatpush1.msra.mxu0 0.0
      %459 = vmatprep.subr.mxu0 0.0
      %460 = vmatpush1.msra.mxu0 0.0
      %461 = vmatprep.subr.mxu0 0.0
      %462 = vmatpush1.msra.mxu0 0.0
      %463 = vmatprep.subr.mxu0 0.0
      %464 = vmatpush1.msra.mxu0 0.0
      %465 = vmatprep.subr.mxu0 0.0
      %466 = vmatpush1.msra.mxu0 0.0
      %467 = vmatprep.subr.mxu0 0.0
      %468 = vmatpush1.msra.mxu0 0.0
      %469 = vmatprep.subr.mxu0 0.0
      %470 = vmatpush1.msra.mxu0 0.0
      %471 = vmatprep.subr.mxu0 %v414
      %472 = vmatpush1.msra.mxu0 %v413
      %473 = vmatprep.subr.mxu0 %v412
      %474 = vmatpush1.msra.mxu0 %v411
      %475 = vmatprep.subr.mxu0 %v410
      %476 = vmatpush1.msra.mxu0 %v409
      %477 = vmatprep.subr.mxu0 %v408
      %478 = vmatpush1.msra.mxu0 %v407
      %479 = vmatprep.subr.mxu0 0.0
      %480 = vmatpush2.msra.mxu0 0.0
      %481 = vmatprep.subr.mxu0 0.0
      %482 = vmatpush2.msra.mxu0 0.0
      %483 = vmatprep.subr.mxu0 0.0
      %484 = vmatpush2.msra.mxu0 0.0
      %485 = vmatprep.subr.mxu0 0.0
      %486 = vmatpush2.msra.mxu0 0.0
      %487 = vmatprep.subr.mxu0 0.0
      %488 = vmatpush2.msra.mxu0 0.0
      %489 = vmatprep.subr.mxu0 0.0
      %490 = vmatpush2.msra.mxu0 0.0
      %491 = vmatprep.subr.mxu0 0.0
      %492 = vmatpush2.msra.mxu0 0.0
      %493 = vmatprep.subr.mxu0 0.0
      %494 = vmatpush2.msra.mxu0 0.0
      %495 = vmatprep.subr.mxu0 0.0
      %496 = vmatpush2.msra.mxu0 0.0
      %497 = vmatprep.subr.mxu0 0.0
      %498 = vmatpush2.msra.mxu0 0.0
      %499 = vmatprep.subr.mxu0 0.0
      %500 = vmatpush2.msra.mxu0 0.0
      %501 = vmatprep.subr.mxu0 0.0
      %502 = vmatpush2.msra.mxu0 0.0
      %503 = vmatprep.subr.mxu0 0.0
      %504 = vmatpush2.msra.mxu0 0.0
      %505 = vmatprep.subr.mxu0 0.0
      %506 = vmatpush2.msra.mxu0 0.0
      %507 = vmatprep.subr.mxu0 0.0
      %508 = vmatpush2.msra.mxu0 0.0
      %509 = vmatprep.subr.mxu0 0.0
      %510 = vmatpush2.msra.mxu0 0.0
      %511 = vmatprep.mubr.f32.mxu0 0.0
      %512 = vmatmul.mubr.f32.gmra.mxu0 %v436
      %v513 = vpop.f32.mrf.mxu0
      %v514 = vadd.f32 %v421, %v513
      %v515 = vpop.f32.mrf.mxu0
      %v516 = vadd.f32 %v421, %v515
      %517 = vmatprep.mubr.f32.mxu0 0.0
      %518 = vmatmul.mubr.f32.gmra.mxu0 %v439
      %v519 = vpop.f32.mrf.mxu0
      %v520 = vadd.f32 %v425, %v519
      %v521 = vpop.f32.mrf.mxu0
      %v522 = vadd.f32 %v425, %v521
      %523 = vmatprep.mubr.f32.mxu0 0.0
      %524 = vmatmul.mubr.f32.gmra.mxu0 %v442
      %v525 = vpop.f32.mrf.mxu0
      %v526 = vadd.f32 %v429, %v525
      %v527 = vpop.f32.mrf.mxu0
      %v528 = vadd.f32 %v429, %v527
      %529 = vmatprep.mubr.f32.mxu0 0.0
      %530 = vmatmul.mubr.f32.gmra.mxu0 %v445
      %v531 = vpop.f32.mrf.mxu0
      %v532 = vadd.f32 %v433, %v531
      %v533 = vpop.f32.mrf.mxu0
      %v534 = vadd.f32 %v433, %v533
      %535 = vdwg.mxu0
      %v536 = vadd.f32 %v237, %v514
      %v537 = vadd.f32 %v238, %v516
      %v538 = vadd.f32 %v239, %v520
      %v539 = vadd.f32 %v240, %v522
      %v540 = vadd.f32 %v241, %v526
      %v541 = vadd.f32 %v242, %v528
      %v542 = vadd.f32 %v243, %v532
      %v543 = vadd.f32 %v244, %v534
      %v544 = vmul.f32 %v536, 0.5
      %v545 = vmul.f32 %v537, 0.5
      %v546 = vmul.f32 %v538, 0.5
      %v547 = vmul.f32 %v539, 0.5
      %v548 = vmul.f32 %v540, 0.5
      %v549 = vmul.f32 %v541, 0.5
      %v550 = vmul.f32 %v542, 0.5
      %v551 = vmul.f32 %v543, 0.5
      %vm552 = vcmp.ge.f32.partialorder %v544, 0.0
      %vm553 = vcmp.ge.f32.partialorder %v545, 0.0
      %vm554 = vcmp.ge.f32.partialorder %v546, 0.0
      %vm555 = vcmp.ge.f32.partialorder %v547, 0.0
      %vm556 = vcmp.ge.f32.partialorder %v548, 0.0
      %vm557 = vcmp.ge.f32.partialorder %v549, 0.0
      %vm558 = vcmp.ge.f32.partialorder %v550, 0.0
      %vm559 = vcmp.ge.f32.partialorder %v551, 0.0
      %560 = vset.pattern.permute.xlu0 3
      %561 = vperm.xlu0 %560, %v245
      %v562 = vpop.permute.xlu0 %561
      %564 = vset.pattern.permute.xlu0 3
      %565 = vperm.xlu0 %564, %v246
      %v566 = vpop.permute.xlu0 %565
      %568 = vset.pattern.permute.xlu0 3
      %569 = vperm.xlu0 %568, %v247
      %v570 = vpop.permute.xlu0 %569
      %572 = vset.pattern.permute.xlu0 3
      %573 = vperm.xlu0 %572, %v248
      %v574 = vpop.permute.xlu0 %573
      %v576 = vmul.f32 %v562, %v544
      %v577 = vmul.f32 %v562, %v545
      %v578 = vmul.f32 %v566, %v546
      %v579 = vmul.f32 %v566, %v547
      %v580 = vmul.f32 %v570, %v548
      %v581 = vmul.f32 %v570, %v549
      %v582 = vmul.f32 %v574, %v550
      %v583 = vmul.f32 %v574, %v551
      %v584 = vsel %vm552, %v544, %v576
      %v585 = vsel %vm553, %v545, %v577
      %v586 = vsel %vm554, %v546, %v578
      %v587 = vsel %vm555, %v547, %v579
      %v588 = vsel %vm556, %v548, %v580
      %v589 = vsel %vm557, %v549, %v581
      %v590 = vsel %vm558, %v550, %v582
      %v591 = vsel %vm559, %v551, %v583
      %592 = vst [vmem:[%s235] sm:$0xff] %v584
      %593 = vst [vmem:[%s235 + $0x8] sm:$0xff] %v585
      %594 = vst [vmem:[%s235 + $0x10] sm:$0xff] %v586
      %595 = vst [vmem:[%s235 + $0x18] sm:$0xff] %v587
      %596 = vst [vmem:[%s235 + $0x20] sm:$0xff] %v588
      %597 = vst [vmem:[%s235 + $0x28] sm:$0xff] %v589
      %598 = vst [vmem:[%s235 + $0x30] sm:$0xff] %v590
      %599 = vst [vmem:[%s235 + $0x38] sm:$0xff] %v591
      %s600 = smul.u32 2, %s20
      %p601 = scmp.lt.s32.totalorder %s19, 1
      %s602 = scalar_select %p601, %s19, 1
      %p603 = scmp.lt.s32.totalorder %s600, 1
      %s604 = scalar_select %p603, %s600, 1
      %s605 = smul.addr %s602, 8
      %s606 = sadd.s32 %s604, %s605
      %s607 = smul.addr %s606, 8
      %s608 = scalar_lea.vmem %s4, %s607
      // Predicated region
      $region37: #{residual_module.1} parent=35 // pred_check
        %p609 = pneg %p138
      $region38: #{residual_module.1} parent=35 // pred_check_branch
        %611 = sbr.rel (%p609) target = $region40
      $region39: #{residual_module.1} parent=35 // pred_region
        %s612 = smul.u32 2, %s20
      $region40: #{residual_module.1} parent=35 // pred_fallthru
        _
    $region36: #{residual_module.1} parent=5 // pred_fallthru
      _
    %p613 = scmp.le.s32.totalorder 2, %s10
    // Predicated region
    $region41: #{residual_module.1} parent=5 // pred_check
      %p614 = pneg %p613
    $region42: #{residual_module.1} parent=5 // pred_check_branch
      %616 = sbr.rel (%p614) target = $region44
    $region43: #{residual_module.1} parent=5 // pred_region
      %s617 = ssub.s32 %s10, 2
      // Predicated region
      $region45: #{residual_module.1} parent=43 // pred_check
        %p618 = pneg %p144
      $region46: #{residual_module.1} parent=43 // pred_check_branch
        %620 = sbr.rel (%p618) target = $region48
      $region47: #{residual_module.1} parent=43 // pred_region
        %s621 = smul.u32 2, %s22
        %p622 = scmp.lt.s32.totalorder %s21, 1
        %s623 = scalar_select %p622, %s21, 1
        %p624 = scmp.lt.s32.totalorder %s621, 1
        %s625 = scalar_select %p624, %s621, 1
        %s626 = smul.addr %s623, 8
        %s627 = sadd.s32 %s625, %s626
        %s628 = smul.addr %s627, 8
        %s629 = scalar_lea.vmem %s4, %s628
      $region48: #{residual_module.1} parent=43 // pred_fallthru
        _
    $region44: #{residual_module.1} parent=5 // pred_fallthru
      _
  $region6: #{residual_module.1} parent=0 // loop_footer
    %s14 = sadd.s32 1, %s10
  $region7: #{residual_module.1} parent=0 // loop_footer_branch
    %9 = sbr.rel target = $region3
  $region8: #{residual_module.1} parent=0 // loop_exit
    _

</llo_original>
